<compile_context>
chip_gen: v7x
topology: tpu7x:2x2x1
jax: 0.10.0
libtpu: 0.0.40
codegen_flags: <defaults>
</compile_context>

<pallas_src>
import functools

import jax
import jax.numpy as jnp
from jax.experimental import pallas as pl
from jax.experimental.pallas import tpu as pltpu


def _round_up(n, m):
    return ((n + m - 1) // m) * m


def mlp_small_kernel(x_ref, w1_ref, b1_ref, w2_ref, b2_ref, o_ref):
    # Whole hidden dim fits in one slab: fully fused, no accumulator needed.
    h = jnp.dot(x_ref[...], w1_ref[...], preferred_element_type=jnp.float32)
    h = jnp.maximum(h + b1_ref[...], 0.0)
    y = jnp.dot(h.astype(w2_ref.dtype), w2_ref[...], preferred_element_type=jnp.float32)
    o_ref[...] = (y + b2_ref[...]).astype(o_ref.dtype)


def mlp_streamed_kernel(x_ref, w1_ref, b1_ref, w2_ref, b2_ref, o_ref, acc_ref):
    k = pl.program_id(1)

    @pl.when(k == 0)
    def _():
        # Fold the fc2 bias into the accumulator init: epilogue becomes a pure cast+store.
        acc_ref[...] = jnp.broadcast_to(
            b2_ref[...].astype(jnp.float32), acc_ref.shape)

    # fc1 slab: (tm, in_p) @ (in_p, th) -> f32, + b1 slab, ReLU.
    h = jnp.dot(x_ref[...], w1_ref[...], preferred_element_type=jnp.float32)
    h = jnp.maximum(h + b1_ref[...], 0.0)

    # fc2 partial: (tm, th) @ (th, out_p), accumulated in f32 VMEM scratch.
    acc_ref[...] += jnp.dot(h.astype(w2_ref.dtype), w2_ref[...],
                            preferred_element_type=jnp.float32)

    @pl.when(k == pl.num_programs(1) - 1)
    def _():
        # dropout(p=0.0) is the identity.
        o_ref[...] = acc_ref[...].astype(o_ref.dtype)


@functools.partial(jax.jit, static_argnames=("tm_max", "th_max"))
def mlp_transformer(x, w1, b1, w2, b2, *, tm_max=512, th_max=1024):
    """x: (batch, seq, in_dim) -> (batch, seq, out_d).

    w1: (in_dim, h_dim) = fc1.weight.T, b1: (h_dim,)
    w2: (h_dim, out_d)  = fc2.weight.T, b2: (out_d,)
    """
    batch, seq, in_dim = x.shape
    h_dim = w1.shape[1]
    out_d = w2.shape[1]
    tokens = batch * seq

    # --- choose TPU-friendly tiles (tm multiple of 8, feature tiles multiple of 128) ---
    tm = min(tm_max, _round_up(tokens, 8))          # big row tile -> MXU occupancy
    th = min(th_max, _round_up(h_dim, 128))         # hidden-reduction tile (streamed)
    in_p = _round_up(in_dim, 128)                   # lane-dense contraction dim
    out_p = _round_up(out_d, 128)                   # lane-dense output (unmasked vst)
    tokens_p = _round_up(tokens, tm)
    h_p = _round_up(h_dim, th)
    kt = h_p // th                                  # number of hidden slabs (static)

    # --- zero-pad everything; zeros are exact no-ops for this MLP ---
    x2d = jnp.pad(x.reshape(tokens, in_dim),
                  ((0, tokens_p - tokens), (0, in_p - in_dim)))
    w1p = jnp.pad(w1, ((0, in_p - in_dim), (0, h_p - h_dim)))
    b1p = jnp.pad(b1.reshape(1, h_dim), ((0, 0), (0, h_p - h_dim)))
    w2p = jnp.pad(w2, ((0, h_p - h_dim), (0, out_p - out_d)))
    b2p = jnp.pad(b2.reshape(1, out_d), ((0, 0), (0, out_p - out_d)))

    # VMEM budget estimate (double-buffered tiles + f32 accumulator) + headroom.
    itm = jnp.dtype(x.dtype).itemsize
    est = (2 * tm * in_p * itm          # x tiles
           + 2 * in_p * th * itm        # w1 slabs
           + 2 * th * 4                 # b1 slabs
           + 2 * th * out_p * itm       # w2 slabs
           + 2 * out_p * 4              # b2
           + 2 * tm * out_p * itm       # out tiles
           + tm * out_p * 4)            # f32 accumulator scratch
    vmem_limit = int(min(max(est + (4 << 20), 32 << 20), 100 << 20))

    if kt == 1:
        # Small-hidden fast path: 1-D grid, no scratch accumulator, no acc->out copy.
        out2d = pl.pallas_call(
            mlp_small_kernel,
            out_shape=jax.ShapeDtypeStruct((tokens_p, out_p), x.dtype),
            grid_spec=pltpu.PrefetchScalarGridSpec(
                num_scalar_prefetch=0,
                grid=(tokens_p // tm,),
                in_specs=[
                    pl.BlockSpec((tm, in_p), lambda i: (i, 0)),     # x row tile
                    pl.BlockSpec((in_p, h_p), lambda i: (0, 0)),    # full w1
                    pl.BlockSpec((1, h_p), lambda i: (0, 0)),       # full b1
                    pl.BlockSpec((h_p, out_p), lambda i: (0, 0)),   # full w2
                    pl.BlockSpec((1, out_p), lambda i: (0, 0)),     # b2
                ],
                out_specs=pl.BlockSpec((tm, out_p), lambda i: (i, 0)),
            ),
            compiler_params=pltpu.CompilerParams(
                dimension_semantics=("parallel",),
                vmem_limit_bytes=vmem_limit,
            ),
        )(x2d, w1p, b1p, w2p, b2p)
    else:
        out2d = pl.pallas_call(
            mlp_streamed_kernel,
            out_shape=jax.ShapeDtypeStruct((tokens_p, out_p), x.dtype),
            grid_spec=pltpu.PrefetchScalarGridSpec(
                num_scalar_prefetch=0,
                grid=(tokens_p // tm, kt),
                in_specs=[
                    pl.BlockSpec((tm, in_p), lambda i, k: (i, 0)),    # x row tile
                    pl.BlockSpec((in_p, th), lambda i, k: (0, k)),    # w1 hidden slab
                    pl.BlockSpec((1, th), lambda i, k: (0, k)),       # b1 hidden slab
                    pl.BlockSpec((th, out_p), lambda i, k: (k, 0)),   # w2 hidden slab
                    pl.BlockSpec((1, out_p), lambda i, k: (0, 0)),    # b2 (constant)
                ],
                out_specs=pl.BlockSpec((tm, out_p), lambda i, k: (i, 0)),
                scratch_shapes=[pltpu.VMEM((tm, out_p), jnp.float32)],
            ),
            compiler_params=pltpu.CompilerParams(
                dimension_semantics=("parallel", "arbitrary"),
                vmem_limit_bytes=vmem_limit,
            ),
        )(x2d, w1p, b1p, w2p, b2p)

    return out2d[:tokens, :out_d].reshape(batch, seq, out_d)


def _make_params(key, in_dim, h_dim, out_d, dtype=jnp.float32):
    k1, k2, k3, k4 = jax.random.split(key, 4)
    w1 = jax.random.normal(k1, (in_dim, h_dim), dtype=dtype) * 0.05   # fc1.weight.T
    b1 = jax.random.normal(k2, (h_dim,), dtype=dtype) * 0.05          # fc1.bias
    w2 = jax.random.normal(k3, (h_dim, out_d), dtype=dtype) * 0.05    # fc2.weight.T
    b2 = jax.random.normal(k4, (out_d,), dtype=dtype) * 0.05          # fc2.bias
    return w1, b1, w2, b2


if __name__ == "__main__":
    key = jax.random.PRNGKey(0)
    kx1, kp1, kx2, kp2 = jax.random.split(key, 4)

    # Case 1: small shapes (single hidden slab -> fused fast path).
    batch, seq, in_dim, h_dim = 2, 8, 32, 64
    out_d = in_dim  # out_d defaults to in_dim in the module
    x = jax.random.normal(kx1, (batch, seq, in_dim), dtype=jnp.float32)
    w1, b1, w2, b2 = _make_params(kp1, in_dim, h_dim, out_d)
    out = jax.block_until_ready(mlp_transformer(x, w1, b1, w2, b2))
    ref = jnp.maximum(x @ w1 + b1, 0.0) @ w2 + b2
    assert out.shape == (batch, seq, out_d)
    assert jnp.allclose(out, ref, atol=1e-5, rtol=1e-5)

    # Case 2: force the streamed (hidden-slab accumulation) path with a small th_max.
    batch2, seq2, in_dim2, h_dim2 = 2, 8, 32, 256
    out_d2 = in_dim2
    x2 = jax.random.normal(kx2, (batch2, seq2, in_dim2), dtype=jnp.float32)
    w1b, b1b, w2b, b2b = _make_params(kp2, in_dim2, h_dim2, out_d2)
    out2 = jax.block_until_ready(
        mlp_transformer(x2, w1b, b1b, w2b, b2b, th_max=128))
    ref2 = jnp.maximum(x2 @ w1b + b1b, 0.0) @ w2b + b2b
    assert out2.shape == (batch2, seq2, out_d2)
    assert jnp.allclose(out2, ref2, atol=1e-5, rtol=1e-5)

    print("KERNEL_OK")
</pallas_src>

<mosaic_0001>
module attributes {stable_mosaic.version = 11 : i64} {
  func.func @mlp_small_kernel(%arg0: i32, %arg1: memref<16x128xf32, #tpu.memory_space<vmem>>, %arg2: memref<128x128xf32, #tpu.memory_space<vmem>>, %arg3: memref<1x128xf32, #tpu.memory_space<vmem>>, %arg4: memref<128x128xf32, #tpu.memory_space<vmem>>, %arg5: memref<1x128xf32, #tpu.memory_space<vmem>>, %arg6: memref<16x128xf32, #tpu.memory_space<vmem>>) attributes {dimension_semantics = [#tpu.dimension_semantics<parallel>], iteration_bounds = array<i64: 1>, scalar_prefetch = 0 : i64, scratch_operands = 0 : i64, tpu.core_type = #tpu.core_type<tc>, window_params = [{transform_indices = @transform_0, window_bounds = array<i64: 16, 128>}, {pipeline_mode = #tpu.pipeline_mode<synchronous>, transform_indices = @transform_1, window_bounds = array<i64: 128, 128>}, {pipeline_mode = #tpu.pipeline_mode<synchronous>, transform_indices = @transform_2, window_bounds = array<i64: 1, 128>}, {pipeline_mode = #tpu.pipeline_mode<synchronous>, transform_indices = @transform_3, window_bounds = array<i64: 128, 128>}, {pipeline_mode = #tpu.pipeline_mode<synchronous>, transform_indices = @transform_4, window_bounds = array<i64: 1, 128>}, {transform_indices = @transform_5, window_bounds = array<i64: 16, 128>}]} {
    %c0 = arith.constant 0 : index
    %c0_0 = arith.constant 0 : index
    %0 = vector.load %arg1[%c0, %c0_0] : memref<16x128xf32, #tpu.memory_space<vmem>>, vector<16x128xf32>
    %c0_1 = arith.constant 0 : index
    %c0_2 = arith.constant 0 : index
    %1 = vector.load %arg2[%c0_1, %c0_2] : memref<128x128xf32, #tpu.memory_space<vmem>>, vector<128x128xf32>
    %cst = arith.constant dense<0.000000e+00> : vector<16x128xf32>
    %2 = tpu.matmul %0, %1, %cst {dimension_numbers = #tpu.dot_dimension_numbers<[1], [0], [0], [1], [0, 0, 1, 1], [], []>} : vector<16x128xf32>, vector<128x128xf32>, vector<16x128xf32> -> vector<16x128xf32>
    %c0_3 = arith.constant 0 : index
    %c0_4 = arith.constant 0 : index
    %3 = vector.load %arg3[%c0_3, %c0_4] : memref<1x128xf32, #tpu.memory_space<vmem>>, vector<1x128xf32>
    %4 = vector.broadcast %3 : vector<1x128xf32> to vector<16x128xf32>
    %5 = arith.addf %2, %4 : vector<16x128xf32>
    %cst_5 = arith.constant 0.000000e+00 : f32
    %6 = vector.broadcast %cst_5 : f32 to vector<16x128xf32>
    %7 = arith.maximumf %5, %6 : vector<16x128xf32>
    %c0_6 = arith.constant 0 : index
    %c0_7 = arith.constant 0 : index
    %8 = vector.load %arg4[%c0_6, %c0_7] : memref<128x128xf32, #tpu.memory_space<vmem>>, vector<128x128xf32>
    %cst_8 = arith.constant dense<0.000000e+00> : vector<16x128xf32>
    %9 = tpu.matmul %7, %8, %cst_8 {dimension_numbers = #tpu.dot_dimension_numbers<[1], [0], [0], [1], [0, 0, 1, 1], [], []>} : vector<16x128xf32>, vector<128x128xf32>, vector<16x128xf32> -> vector<16x128xf32>
    %c0_9 = arith.constant 0 : index
    %c0_10 = arith.constant 0 : index
    %10 = vector.load %arg5[%c0_9, %c0_10] : memref<1x128xf32, #tpu.memory_space<vmem>>, vector<1x128xf32>
    %11 = vector.broadcast %10 : vector<1x128xf32> to vector<16x128xf32>
    %12 = arith.addf %9, %11 : vector<16x128xf32>
    %c0_11 = arith.constant 0 : index
    %c0_12 = arith.constant 0 : index
    %13 = vector.load %arg6[%c0_11, %c0_12] : memref<16x128xf32, #tpu.memory_space<vmem>>, vector<16x128xf32>
    tpu.vector_store %arg6[%c0_11, %c0_12], %12 {strides = array<i32>} : memref<16x128xf32, #tpu.memory_space<vmem>>, vector<16x128xf32>,
    return
  }
  func.func @transform_0(%arg0: i32) -> (i32, i32) {
    %c0_i32 = arith.constant 0 : i32
    %c0_i32_0 = arith.constant 0 : i32
    return %arg0, %c0_i32 : i32, i32
  }
  func.func @transform_1(%arg0: i32) -> (i32, i32) {
    %c0_i32 = arith.constant 0 : i32
    %c0_i32_0 = arith.constant 0 : i32
    %c0_i32_1 = arith.constant 0 : i32
    return %c0_i32, %c0_i32_0 : i32, i32
  }
  func.func @transform_2(%arg0: i32) -> (i32, i32) {
    %c0_i32 = arith.constant 0 : i32
    %c0_i32_0 = arith.constant 0 : i32
    %c0_i32_1 = arith.constant 0 : i32
    return %c0_i32, %c0_i32_0 : i32, i32
  }
  func.func @transform_3(%arg0: i32) -> (i32, i32) {
    %c0_i32 = arith.constant 0 : i32
    %c0_i32_0 = arith.constant 0 : i32
    %c0_i32_1 = arith.constant 0 : i32
    return %c0_i32, %c0_i32_0 : i32, i32
  }
  func.func @transform_4(%arg0: i32) -> (i32, i32) {
    %c0_i32 = arith.constant 0 : i32
    %c0_i32_0 = arith.constant 0 : i32
    %c0_i32_1 = arith.constant 0 : i32
    return %c0_i32, %c0_i32_0 : i32, i32
  }
  func.func @transform_5(%arg0: i32) -> (i32, i32) {
    %c0_i32 = arith.constant 0 : i32
    %c0_i32_0 = arith.constant 0 : i32
    return %arg0, %c0_i32 : i32, i32
  }
}

</mosaic_0001>

<llo_original>
// kernel: mlp_transformer.1
$region0: #{mlp_transformer.1}
  #allocation0 [shape = 'u32[]', space=smem, size = 0x4, offset = 0x4, fixed_abs, tag = 'smem constant byte address 0x4 - core index']
  #allocation1 [shape = 'u32[144,128]{1,0:T(1,128)}', space=vmem, size = 0x12000, scoped, tag = 'internal scratch']
  %s0 = inlined_call_operand.vmem [shape: f32[16,128], index: 0, kind: input, shape index: {}]
  %s1 = inlined_call_operand.vmem [shape: f32[128,128], index: 1, kind: input, shape index: {}]
  %s2 = inlined_call_operand.vmem [shape: f32[1,128], index: 2, kind: input, shape index: {}]
  %s3 = inlined_call_operand.vmem [shape: f32[128,128], index: 3, kind: input, shape index: {}]
  %s4 = inlined_call_operand.vmem [shape: f32[1,128], index: 4, kind: input, shape index: {}]
  %s5 = inlined_call_operand.vmem [shape: f32[16,128], index: 5, kind: output, shape index: {}]
  %s6 = sld [smem:[#allocation0]]
  $region30: #{mlp_transformer.1} parent=0
    _
  %s8 = ssub.s32 1, %s6
  %s9 = scalar_select 0, %s8, %s6
  // Predicated region
  $region2: #{mlp_transformer.1} parent=0 // pred_check
    _
  $region3: #{mlp_transformer.1} parent=0 // pred_check_branch
    %11 = sbr.rel (0) target = $region5
  $region4: #{mlp_transformer.1} parent=0 // pred_region
    _
  $region5: #{mlp_transformer.1} parent=0 // pred_fallthru
    _
  // Predicated region
  $region6: #{mlp_transformer.1} parent=0 // pred_check
    _
  $region7: #{mlp_transformer.1} parent=0 // pred_check_branch
    %13 = sbr.rel (0) target = $region9
  $region8: #{mlp_transformer.1} parent=0 // pred_region
    _
  $region9: #{mlp_transformer.1} parent=0 // pred_fallthru
    _
  // Predicated region
  $region10: #{mlp_transformer.1} parent=0 // pred_check
    _
  $region11: #{mlp_transformer.1} parent=0 // pred_check_branch
    %15 = sbr.rel (0) target = $region13
  $region12: #{mlp_transformer.1} parent=0 // pred_region
    _
  $region13: #{mlp_transformer.1} parent=0 // pred_fallthru
    _
  // Predicated region
  $region14: #{mlp_transformer.1} parent=0 // pred_check
    _
  $region15: #{mlp_transformer.1} parent=0 // pred_check_branch
    %17 = sbr.rel (0) target = $region17
  $region16: #{mlp_transformer.1} parent=0 // pred_region
    _
  $region17: #{mlp_transformer.1} parent=0 // pred_fallthru
    _
  // Predicated region
  $region18: #{mlp_transformer.1} parent=0 // pred_check
    _
  $region19: #{mlp_transformer.1} parent=0 // pred_check_branch
    %19 = sbr.rel (0) target = $region21
  $region20: #{mlp_transformer.1} parent=0 // pred_region
    _
  $region21: #{mlp_transformer.1} parent=0 // pred_fallthru
    _
  %v20 = vld [vmem:[%s0] sm:$0xff]
  %v21 = vld [vmem:[%s0 + $0x8] sm:$0xff]
  %v22 = vld [vmem:[%s1] sm:$0xff]
  %v23 = vld [vmem:[%s1 + $0x8] sm:$0xff]
  %v24 = vld [vmem:[%s1 + $0x10] sm:$0xff]
  %v25 = vld [vmem:[%s1 + $0x18] sm:$0xff]
  %v26 = vld [vmem:[%s1 + $0x20] sm:$0xff]
  %v27 = vld [vmem:[%s1 + $0x28] sm:$0xff]
  %v28 = vld [vmem:[%s1 + $0x30] sm:$0xff]
  %v29 = vld [vmem:[%s1 + $0x38] sm:$0xff]
  %v30 = vld [vmem:[%s1 + $0x40] sm:$0xff]
  %v31 = vld [vmem:[%s1 + $0x48] sm:$0xff]
  %v32 = vld [vmem:[%s1 + $0x50] sm:$0xff]
  %v33 = vld [vmem:[%s1 + $0x58] sm:$0xff]
  %v34 = vld [vmem:[%s1 + $0x60] sm:$0xff]
  %v35 = vld [vmem:[%s1 + $0x68] sm:$0xff]
  %v36 = vld [vmem:[%s1 + $0x70] sm:$0xff]
  %v37 = vld [vmem:[%s1 + $0x78] sm:$0xff]
  %v38 = vld [vmem:[%s2] sm:$0x1]
  %v40 = vlaneseq
  %v41 = vshrl.u32 %v40, 7
  %v42 = vsub.s32 0, %v41
  %v43 = vrot.slane %v38, %v42
  %45 = vmatprep.subr.mxu0 0.0
  %46 = vmatpush1.msra.mxu0 %v22
  %47 = vmatprep.subr.mxu0 0.0
  %48 = vmatpush1.msra.mxu0 %v23
  %49 = vmatprep.subr.mxu0 0.0
  %50 = vmatpush1.msra.mxu0 %v24
  %51 = vmatprep.subr.mxu0 0.0
  %52 = vmatpush1.msra.mxu0 %v25
  %53 = vmatprep.subr.mxu0 0.0
  %54 = vmatpush1.msra.mxu0 %v26
  %55 = vmatprep.subr.mxu0 0.0
  %56 = vmatpush1.msra.mxu0 %v27
  %57 = vmatprep.subr.mxu0 0.0
  %58 = vmatpush1.msra.mxu0 %v28
  %59 = vmatprep.subr.mxu0 0.0
  %60 = vmatpush1.msra.mxu0 %v29
  %61 = vmatprep.subr.mxu0 0.0
  %62 = vmatpush1.msra.mxu0 %v30
  %63 = vmatprep.subr.mxu0 0.0
  %64 = vmatpush1.msra.mxu0 %v31
  %65 = vmatprep.subr.mxu0 0.0
  %66 = vmatpush1.msra.mxu0 %v32
  %67 = vmatprep.subr.mxu0 0.0
  %68 = vmatpush1.msra.mxu0 %v33
  %69 = vmatprep.subr.mxu0 0.0
  %70 = vmatpush1.msra.mxu0 %v34
  %71 = vmatprep.subr.mxu0 0.0
  %72 = vmatpush1.msra.mxu0 %v35
  %73 = vmatprep.subr.mxu0 0.0
  %74 = vmatpush1.msra.mxu0 %v36
  %75 = vmatprep.subr.mxu0 0.0
  %76 = vmatpush1.msra.mxu0 %v37
  %77 = vmatprep.subr.mxu0 0.0
  %78 = vmatpush1.msra.mxu0 0.0
  %79 = vmatprep.subr.mxu0 0.0
  %80 = vmatpush1.msra.mxu0 0.0
  %81 = vmatprep.subr.mxu0 0.0
  %82 = vmatpush1.msra.mxu0 0.0
  %83 = vmatprep.subr.mxu0 0.0
  %84 = vmatpush1.msra.mxu0 0.0
  %85 = vmatprep.subr.mxu0 0.0
  %86 = vmatpush1.msra.mxu0 0.0
  %87 = vmatprep.subr.mxu0 0.0
  %88 = vmatpush1.msra.mxu0 0.0
  %89 = vmatprep.subr.mxu0 0.0
  %90 = vmatpush1.msra.mxu0 0.0
  %91 = vmatprep.subr.mxu0 0.0
  %92 = vmatpush1.msra.mxu0 0.0
  %93 = vmatprep.subr.mxu0 0.0
  %94 = vmatpush1.msra.mxu0 0.0
  %95 = vmatprep.subr.mxu0 0.0
  %96 = vmatpush1.msra.mxu0 0.0
  %97 = vmatprep.subr.mxu0 0.0
  %98 = vmatpush1.msra.mxu0 0.0
  %99 = vmatprep.subr.mxu0 0.0
  %100 = vmatpush1.msra.mxu0 0.0
  %101 = vmatprep.subr.mxu0 0.0
  %102 = vmatpush1.msra.mxu0 0.0
  %103 = vmatprep.subr.mxu0 0.0
  %104 = vmatpush1.msra.mxu0 0.0
  %105 = vmatprep.subr.mxu0 0.0
  %106 = vmatpush1.msra.mxu0 0.0
  %107 = vmatprep.subr.mxu0 0.0
  %108 = vmatpush1.msra.mxu0 0.0
  %109 = vmatprep.mubr.f32.mxu0 0.0
  %110 = vmatmul.mubr.f32.gmra.mrb[0].mxu0 %v20
  %v111 = vpop.f32.mrb[0].mxu0
  %v112 = vadd.f32 %v43, %v111
  %v113 = vpop.f32.mrb[0].mxu0
  %114 = vmatprep.mubr.f32.mxu0 0.0
  %115 = vmatmul.mubr.f32.gmra.mrb[0].mxu0 %v21
  %v116 = vpop.f32.mrb[0].mxu0
  %v117 = vadd.f32 %v43, %v116
  %v118 = vpop.f32.mrb[0].mxu0
  %119 = vdwg.mxu0
  %v120 = vmax.f32 %v112, 0.0
  %v121 = vmax.f32 %v117, 0.0
  %v122 = vld [vmem:[%s3] sm:$0xff]
  %v123 = vld [vmem:[%s3 + $0x8] sm:$0xff]
  %v124 = vld [vmem:[%s3 + $0x10] sm:$0xff]
  %v125 = vld [vmem:[%s3 + $0x18] sm:$0xff]
  %v126 = vld [vmem:[%s3 + $0x20] sm:$0xff]
  %v127 = vld [vmem:[%s3 + $0x28] sm:$0xff]
  %v128 = vld [vmem:[%s3 + $0x30] sm:$0xff]
  %v129 = vld [vmem:[%s3 + $0x38] sm:$0xff]
  %v130 = vld [vmem:[%s3 + $0x40] sm:$0xff]
  %v131 = vld [vmem:[%s3 + $0x48] sm:$0xff]
  %v132 = vld [vmem:[%s3 + $0x50] sm:$0xff]
  %v133 = vld [vmem:[%s3 + $0x58] sm:$0xff]
  %v134 = vld [vmem:[%s3 + $0x60] sm:$0xff]
  %v135 = vld [vmem:[%s3 + $0x68] sm:$0xff]
  %v136 = vld [vmem:[%s3 + $0x70] sm:$0xff]
  %v137 = vld [vmem:[%s3 + $0x78] sm:$0xff]
  %v138 = vld [vmem:[%s4] sm:$0x1]
  %v140 = vlaneseq
  %v141 = vshrl.u32 %v140, 7
  %v142 = vsub.s32 0, %v141
  %v143 = vrot.slane %v138, %v142
  %145 = vmatprep.subr.mxu0 0.0
  %146 = vmatpush1.msra.mxu0 %v122
  %147 = vmatprep.subr.mxu0 0.0
  %148 = vmatpush1.msra.mxu0 %v123
  %149 = vmatprep.subr.mxu0 0.0
  %150 = vmatpush1.msra.mxu0 %v124
  %151 = vmatprep.subr.mxu0 0.0
  %152 = vmatpush1.msra.mxu0 %v125
  %153 = vmatprep.subr.mxu0 0.0
  %154 = vmatpush1.msra.mxu0 %v126
  %155 = vmatprep.subr.mxu0 0.0
  %156 = vmatpush1.msra.mxu0 %v127
  %157 = vmatprep.subr.mxu0 0.0
  %158 = vmatpush1.msra.mxu0 %v128
  %159 = vmatprep.subr.mxu0 0.0
  %160 = vmatpush1.msra.mxu0 %v129
  %161 = vmatprep.subr.mxu0 0.0
  %162 = vmatpush1.msra.mxu0 %v130
  %163 = vmatprep.subr.mxu0 0.0
  %164 = vmatpush1.msra.mxu0 %v131
  %165 = vmatprep.subr.mxu0 0.0
  %166 = vmatpush1.msra.mxu0 %v132
  %167 = vmatprep.subr.mxu0 0.0
  %168 = vmatpush1.msra.mxu0 %v133
  %169 = vmatprep.subr.mxu0 0.0
  %170 = vmatpush1.msra.mxu0 %v134
  %171 = vmatprep.subr.mxu0 0.0
  %172 = vmatpush1.msra.mxu0 %v135
  %173 = vmatprep.subr.mxu0 0.0
  %174 = vmatpush1.msra.mxu0 %v136
  %175 = vmatprep.subr.mxu0 0.0
  %176 = vmatpush1.msra.mxu0 %v137
  %177 = vmatprep.subr.mxu0 0.0
  %178 = vmatpush1.msra.mxu0 0.0
  %179 = vmatprep.subr.mxu0 0.0
  %180 = vmatpush1.msra.mxu0 0.0
  %181 = vmatprep.subr.mxu0 0.0
  %182 = vmatpush1.msra.mxu0 0.0
  %183 = vmatprep.subr.mxu0 0.0
  %184 = vmatpush1.msra.mxu0 0.0
  %185 = vmatprep.subr.mxu0 0.0
  %186 = vmatpush1.msra.mxu0 0.0
  %187 = vmatprep.subr.mxu0 0.0
  %188 = vmatpush1.msra.mxu0 0.0
  %189 = vmatprep.subr.mxu0 0.0
  %190 = vmatpush1.msra.mxu0 0.0
  %191 = vmatprep.subr.mxu0 0.0
  %192 = vmatpush1.msra.mxu0 0.0
  %193 = vmatprep.subr.mxu0 0.0
  %194 = vmatpush1.msra.mxu0 0.0
  %195 = vmatprep.subr.mxu0 0.0
  %196 = vmatpush1.msra.mxu0 0.0
  %197 = vmatprep.subr.mxu0 0.0
  %198 = vmatpush1.msra.mxu0 0.0
  %199 = vmatprep.subr.mxu0 0.0
  %200 = vmatpush1.msra.mxu0 0.0
  %201 = vmatprep.subr.mxu0 0.0
  %202 = vmatpush1.msra.mxu0 0.0
  %203 = vmatprep.subr.mxu0 0.0
  %204 = vmatpush1.msra.mxu0 0.0
  %205 = vmatprep.subr.mxu0 0.0
  %206 = vmatpush1.msra.mxu0 0.0
  %207 = vmatprep.subr.mxu0 0.0
  %208 = vmatpush1.msra.mxu0 0.0
  %209 = vmatprep.mubr.f32.mxu0 0.0
  %210 = vmatmul.mubr.f32.gmra.mrb[0].mxu0 %v120
  %v211 = vpop.f32.mrb[0].mxu0
  %v212 = vadd.f32 %v143, %v211
  %v213 = vpop.f32.mrb[0].mxu0
  %214 = vmatprep.mubr.f32.mxu0 0.0
  %215 = vmatmul.mubr.f32.gmra.mrb[0].mxu0 %v121
  %v216 = vpop.f32.mrb[0].mxu0
  %v217 = vadd.f32 %v143, %v216
  %v218 = vpop.f32.mrb[0].mxu0
  %219 = vdwg.mxu0
  %220 = vst [vmem:[%s5] sm:$0xff] %v212
  %221 = vst [vmem:[%s5 + $0x8] sm:$0xff] %v217
  // Predicated region
  $region22: #{mlp_transformer.1} parent=0 // pred_check
    _
  $region23: #{mlp_transformer.1} parent=0 // pred_check_branch
    %223 = sbr.rel (0) target = $region25
  $region24: #{mlp_transformer.1} parent=0 // pred_region
    _
  $region25: #{mlp_transformer.1} parent=0 // pred_fallthru
    _
  // Predicated region
  $region26: #{mlp_transformer.1} parent=0 // pred_check
    _
  $region27: #{mlp_transformer.1} parent=0 // pred_check_branch
    %225 = sbr.rel (0) target = $region29
  $region28: #{mlp_transformer.1} parent=0 // pred_region
    _
  $region29: #{mlp_transformer.1} parent=0 // pred_fallthru
    _

</llo_original>
